<compile_context>
chip_gen: v7x
topology: tpu7x:2x2x1
jax: 0.10.0
libtpu: 0.0.40
codegen_flags: <defaults>
</compile_context>

<pallas_src>
import jax
import jax.numpy as jnp
import numpy as np
from jax import lax
from jax.experimental import pallas as pl
from jax.experimental.pallas import tpu as pltpu

EPS = 1e-5
LANE = 128


def _cdiv(a, b):
  return -(-a // b)


def _round_up(a, m):
  return _cdiv(a, m) * m


def unet_conv_kernel(x_ref, w1_ref, sh1_ref, w2_ref, sh2_ref, o_ref, y1_ref):
  """Fused (conv+BN+ReLU) x2 on a block of B images stacked along rows.

  x_ref:   (B*H, W*Cin)      f32 input block, rows flattened channels-last
  w1_ref:  (KH, W*Cin, L1p)  bf16 block-Toeplitz conv1 weights (BN scale folded,
                             columns zero-padded to a multiple of 128)
  sh1_ref: (1, L1p)          f32 shift = (bias - mean)*scale + beta (0 in pad lanes)
  w2_ref:  (KH, L1p, L2p)    bf16 conv2 weights (rows/cols zero-padded)
  sh2_ref: (1, L2p)          f32
  o_ref:   (B*H, L2p)        f32 output block (wrapper reads only the valid rows)
  y1_ref:  (B*H-KH+1, L1p)   f32 VMEM scratch for the stage-1 activation
  """
  KH = w1_ref.shape[0]
  R = x_ref.shape[0]
  L1 = w1_ref.shape[2]
  L2 = w2_ref.shape[2]
  RV1 = R - (KH - 1)   # stage-1 rows (cross-image boundary rows are garbage,
  RV2 = RV1 - (KH - 1)  # stage-2 rows  discarded by the wrapper)

  # ---- stage 1: conv1 as KH MXU matmuls over the whole image block + BN + ReLU ----
  acc1 = jnp.zeros((RV1, L1), jnp.float32)
  for kh in range(KH):  # static unroll
    acc1 = acc1 + jnp.dot(
        x_ref[kh:kh + RV1, :].astype(jnp.bfloat16), w1_ref[kh],
        preferred_element_type=jnp.float32)
  y1_ref[...] = jnp.maximum(acc1 + sh1_ref[...], 0.0)

  # ---- stage 2: conv2 on the VMEM-resident stage-1 activation + BN + ReLU ----
  acc2 = jnp.zeros((RV2, L2), jnp.float32)
  for kh in range(KH):
    acc2 = acc2 + jnp.dot(
        y1_ref[kh:kh + RV2, :].astype(jnp.bfloat16), w2_ref[kh],
        preferred_element_type=jnp.float32)
  # Rows [RV2, R) of the output block are never read by the wrapper.
  o_ref[0:RV2, :] = jnp.maximum(acc2 + sh2_ref[...], 0.0).astype(o_ref.dtype)


def make_toeplitz_weights(w_hwio, scale, in_width, in_rows, out_cols):
  """(KH,KW,Cin,Cout) HWIO weights -> (KH, in_rows, out_cols) block-Toeplitz.

  T[kh, (wo+kw)*Cin + ci, wo*Cout + co] = w[kh,kw,ci,co] * scale[co]; every other
  entry (including the lane padding beyond Wo*Cout / in_width*Cin) is zero, so a
  VALID conv along W becomes  out_row = sum_kh x_row[kh] @ T[kh].
  Built with a single vectorized scatter (wrapper-side, one-time).
  """
  KH, KW, Cin, Cout = w_hwio.shape
  Wo = in_width - KW + 1
  w_scaled = (w_hwio * scale[None, None, None, :]).astype(jnp.float32)
  kw = np.arange(KW)[:, None, None, None]
  wo = np.arange(Wo)[None, :, None, None]
  ci = np.arange(Cin)[None, None, :, None]
  co = np.arange(Cout)[None, None, None, :]
  rows = (wo + kw) * Cin + ci                       # (KW, Wo, Cin, 1)
  cols = wo * Cout + co                             # (1,  Wo, 1, Cout)
  vals = jnp.broadcast_to(w_scaled[:, :, None, :, :], (KH, KW, Wo, Cin, Cout))
  t = jnp.zeros((KH, in_rows, out_cols), jnp.float32)
  return t.at[:, rows, cols].set(vals)


def make_params(key, in_channels, out_channels, kernel_size):
  """Deterministic synthetic params for one conv+BN stage."""
  ks = jax.random.split(key, 6)
  std = np.sqrt(2.0 / (kernel_size * kernel_size * in_channels))
  w = std * jax.random.normal(
      ks[0], (kernel_size, kernel_size, in_channels, out_channels), jnp.float32)
  b = 0.1 * jax.random.normal(ks[1], (out_channels,), jnp.float32)
  gamma = 1.0 + 0.1 * jax.random.normal(ks[2], (out_channels,), jnp.float32)
  beta = 0.1 * jax.random.normal(ks[3], (out_channels,), jnp.float32)
  r_mean = 0.1 * jax.random.normal(ks[4], (out_channels,), jnp.float32)
  r_var = jax.random.uniform(ks[5], (out_channels,), jnp.float32, 0.5, 1.5)
  return dict(w=w, b=b, gamma=gamma, beta=beta, r_mean=r_mean, r_var=r_var)


def fold_bn(p):
  scale = p["gamma"] / jnp.sqrt(p["r_var"] + EPS)
  shift = (p["b"] - p["r_mean"]) * scale + p["beta"]
  return scale, shift


def _choose_images_per_block(n, h, target_rows=256):
  """Fill the MXU M dimension (~target_rows rows per grid step); keep >=2 grid
  steps (v7x has 2 TensorCores) only if that does not shrink M below target."""
  b = max(1, min(n, _cdiv(target_rows, max(h, 1))))
  if _cdiv(n, b) < 2 and _cdiv(n, 2) * h >= target_rows:
    b = _cdiv(n, 2)
  return b


def unet_conv_forward(x_nchw, p1, p2, images_per_block=None):
  """Full UnetConv forward. Input/output in PyTorch NCHW layout."""
  N, Cin, H, W = x_nchw.shape
  KH, KW, _, C1 = p1["w"].shape
  C2 = p2["w"].shape[3]
  Ho1, Wo1 = H - KH + 1, W - KW + 1
  Ho2, Wo2 = Ho1 - KH + 1, Wo1 - KW + 1
  L0 = W * Cin
  L1 = _round_up(Wo1 * C1, LANE)   # lane-dense stage-1 width (multiple of 128)
  L2 = _round_up(Wo2 * C2, LANE)   # lane-dense output width

  B = images_per_block or _choose_images_per_block(N, H)
  G = _cdiv(N, B)
  Ntot = G * B
  R = B * H

  # NCHW -> NHWC -> (Ntot*H, W*Cin): B images stacked along rows per grid step.
  x = jnp.transpose(x_nchw, (0, 2, 3, 1)).reshape(N, H, L0)
  if Ntot != N:
    x = jnp.concatenate([x, jnp.zeros((Ntot - N, H, L0), x.dtype)], axis=0)
  x = x.reshape(Ntot * H, L0).astype(jnp.float32)

  s1, t1 = fold_bn(p1)
  s2, t2 = fold_bn(p2)
  # bf16 operands for the MXU (f32 accumulate + f32 epilogue in the kernel).
  w1 = make_toeplitz_weights(p1["w"], s1, W, L0, L1).astype(jnp.bfloat16)
  w2 = make_toeplitz_weights(p2["w"], s2, Wo1, L1, L2).astype(jnp.bfloat16)
  sh1 = jnp.zeros((1, L1), jnp.float32).at[0, :Wo1 * C1].set(jnp.tile(t1, Wo1))
  sh2 = jnp.zeros((1, L2), jnp.float32).at[0, :Wo2 * C2].set(jnp.tile(t2, Wo2))

  out = pl.pallas_call(
      unet_conv_kernel,
      out_shape=jax.ShapeDtypeStruct((Ntot * H, L2), jnp.float32),
      grid=(G,),
      in_specs=[
          pl.BlockSpec((R, L0), lambda g: (g, 0)),
          pl.BlockSpec((KH, L0, L1), lambda g: (0, 0, 0)),
          pl.BlockSpec((1, L1), lambda g: (0, 0)),
          pl.BlockSpec((KH, L1, L2), lambda g: (0, 0, 0)),
          pl.BlockSpec((1, L2), lambda g: (0, 0)),
      ],
      out_specs=pl.BlockSpec((R, L2), lambda g: (g, 0)),
      scratch_shapes=[pltpu.VMEM((R - KH + 1, L1), jnp.float32)],
      compiler_params=pltpu.CompilerParams(
          dimension_semantics=("parallel",)),
  )(x, w1, sh1, w2, sh2)

  # (Ntot*H, L2) -> valid rows/lanes -> NHWC -> NCHW (wrapper layout plumbing).
  out = out.reshape(Ntot, H, L2)[:N, :Ho2, :Wo2 * C2].reshape(N, Ho2, Wo2, C2)
  return jnp.transpose(out, (0, 3, 1, 2)).astype(x_nchw.dtype)


def ref_forward(x_nchw, p1, p2):
  """Pure-JAX f32 reference (lax.conv) with identical eval-mode semantics."""
  def stage(x, p):
    y = lax.conv_general_dilated(
        x, p["w"], window_strides=(1, 1), padding="VALID",
        dimension_numbers=("NCHW", "HWIO", "NCHW"))
    y = y + p["b"][None, :, None, None]
    scale = p["gamma"] / jnp.sqrt(p["r_var"] + EPS)
    y = (y - p["r_mean"][None, :, None, None]) * scale[None, :, None, None] \
        + p["beta"][None, :, None, None]
    return jnp.maximum(y, 0.0)
  return stage(stage(x_nchw, p1), p2)


if __name__ == "__main__":
  N, Cin, Cout, H, W, K = 2, 4, 8, 16, 16, 3

  key = jax.random.PRNGKey(0)
  kx, k1, k2 = jax.random.split(key, 3)
  x = jax.random.normal(kx, (N, Cin, H, W), jnp.float32)  # PyTorch NCHW input

  p1 = make_params(k1, Cin, Cout, K)
  p2 = make_params(k2, Cout, Cout, K)

  out = jax.block_until_ready(unet_conv_forward(x, p1, p2))
  ref = jax.block_until_ready(ref_forward(x, p1, p2))

  assert out.shape == (N, Cout, H - 2 * (K - 1), W - 2 * (K - 1)), out.shape
  # bf16 MXU operands (f32 accumulate / f32 epilogue) vs. f32 reference.
  if not jnp.allclose(out, ref, atol=5e-2, rtol=5e-2):
    raise AssertionError(
        f"Pallas output mismatch: max abs err = {jnp.max(jnp.abs(out - ref))}")

  print("KERNEL_OK")
</pallas_src>

<mosaic_0001>
module attributes {stable_mosaic.version = 11 : i64} {
  func.func @unet_conv_kernel(%arg0: i32, %arg1: memref<32x64xf32, #tpu.memory_space<vmem>>, %arg2: memref<3x64x128xbf16, #tpu.memory_space<vmem>>, %arg3: memref<1x128xf32, #tpu.memory_space<vmem>>, %arg4: memref<3x128x128xbf16, #tpu.memory_space<vmem>>, %arg5: memref<1x128xf32, #tpu.memory_space<vmem>>, %arg6: memref<32x128xf32, #tpu.memory_space<vmem>>, %arg7: memref<30x128xf32, #tpu.memory_space<vmem>>) attributes {dimension_semantics = [#tpu.dimension_semantics<parallel>], iteration_bounds = array<i64: 1>, scalar_prefetch = 0 : i64, scratch_operands = 1 : i64, tpu.core_type = #tpu.core_type<tc>, window_params = [{transform_indices = @transform_0, window_bounds = array<i64: 32, 64>}, {pipeline_mode = #tpu.pipeline_mode<synchronous>, transform_indices = @transform_1, window_bounds = array<i64: 3, 64, 128>}, {pipeline_mode = #tpu.pipeline_mode<synchronous>, transform_indices = @transform_2, window_bounds = array<i64: 1, 128>}, {pipeline_mode = #tpu.pipeline_mode<synchronous>, transform_indices = @transform_3, window_bounds = array<i64: 3, 128, 128>}, {pipeline_mode = #tpu.pipeline_mode<synchronous>, transform_indices = @transform_4, window_bounds = array<i64: 1, 128>}, {transform_indices = @transform_5, window_bounds = array<i64: 32, 128>}]} {
    %cst = arith.constant 0.000000e+00 : f32
    %0 = vector.broadcast %cst : f32 to vector<30x128xf32>
    %c0 = arith.constant 0 : index
    %c0_0 = arith.constant 0 : index
    %1 = vector.load %arg1[%c0, %c0_0] : memref<32x64xf32, #tpu.memory_space<vmem>>, vector<30x64xf32>
    %2 = arith.truncf %1 : vector<30x64xf32> to vector<30x64xbf16>
    %c0_1 = arith.constant 0 : index
    %c0_2 = arith.constant 0 : index
    %c0_3 = arith.constant 0 : index
    %3 = vector.load %arg2[%c0_1, %c0_2, %c0_3] : memref<3x64x128xbf16, #tpu.memory_space<vmem>>, vector<1x64x128xbf16>
    %4 = vector.shape_cast %3 : vector<1x64x128xbf16> to vector<64x128xbf16>
    %cst_4 = arith.constant dense<0.000000e+00> : vector<30x128xf32>
    %5 = tpu.matmul %2, %4, %cst_4 {dimension_numbers = #tpu.dot_dimension_numbers<[1], [0], [0], [1], [0, 0, 1, 1], [], []>} : vector<30x64xbf16>, vector<64x128xbf16>, vector<30x128xf32> -> vector<30x128xf32>
    %6 = arith.addf %0, %5 : vector<30x128xf32>
    %c1 = arith.constant 1 : index
    %c0_5 = arith.constant 0 : index
    %7 = vector.load %arg1[%c1, %c0_5] : memref<32x64xf32, #tpu.memory_space<vmem>>, vector<30x64xf32>
    %8 = arith.truncf %7 : vector<30x64xf32> to vector<30x64xbf16>
    %c1_6 = arith.constant 1 : index
    %c0_7 = arith.constant 0 : index
    %c0_8 = arith.constant 0 : index
    %9 = vector.load %arg2[%c1_6, %c0_7, %c0_8] : memref<3x64x128xbf16, #tpu.memory_space<vmem>>, vector<1x64x128xbf16>
    %10 = vector.shape_cast %9 : vector<1x64x128xbf16> to vector<64x128xbf16>
    %cst_9 = arith.constant dense<0.000000e+00> : vector<30x128xf32>
    %11 = tpu.matmul %8, %10, %cst_9 {dimension_numbers = #tpu.dot_dimension_numbers<[1], [0], [0], [1], [0, 0, 1, 1], [], []>} : vector<30x64xbf16>, vector<64x128xbf16>, vector<30x128xf32> -> vector<30x128xf32>
    %12 = arith.addf %6, %11 : vector<30x128xf32>
    %c2 = arith.constant 2 : index
    %c0_10 = arith.constant 0 : index
    %13 = vector.load %arg1[%c2, %c0_10] : memref<32x64xf32, #tpu.memory_space<vmem>>, vector<30x64xf32>
    %14 = arith.truncf %13 : vector<30x64xf32> to vector<30x64xbf16>
    %c2_11 = arith.constant 2 : index
    %c0_12 = arith.constant 0 : index
    %c0_13 = arith.constant 0 : index
    %15 = vector.load %arg2[%c2_11, %c0_12, %c0_13] : memref<3x64x128xbf16, #tpu.memory_space<vmem>>, vector<1x64x128xbf16>
    %16 = vector.shape_cast %15 : vector<1x64x128xbf16> to vector<64x128xbf16>
    %cst_14 = arith.constant dense<0.000000e+00> : vector<30x128xf32>
    %17 = tpu.matmul %14, %16, %cst_14 {dimension_numbers = #tpu.dot_dimension_numbers<[1], [0], [0], [1], [0, 0, 1, 1], [], []>} : vector<30x64xbf16>, vector<64x128xbf16>, vector<30x128xf32> -> vector<30x128xf32>
    %18 = arith.addf %12, %17 : vector<30x128xf32>
    %c0_15 = arith.constant 0 : index
    %c0_16 = arith.constant 0 : index
    %19 = vector.load %arg3[%c0_15, %c0_16] : memref<1x128xf32, #tpu.memory_space<vmem>>, vector<1x128xf32>
    %20 = vector.broadcast %19 : vector<1x128xf32> to vector<30x128xf32>
    %21 = arith.addf %18, %20 : vector<30x128xf32>
    %cst_17 = arith.constant 0.000000e+00 : f32
    %22 = vector.broadcast %cst_17 : f32 to vector<30x128xf32>
    %23 = arith.maximumf %21, %22 : vector<30x128xf32>
    %c0_18 = arith.constant 0 : index
    %c0_19 = arith.constant 0 : index
    %24 = vector.load %arg7[%c0_18, %c0_19] : memref<30x128xf32, #tpu.memory_space<vmem>>, vector<30x128xf32>
    tpu.vector_store %arg7[%c0_18, %c0_19], %23 {strides = array<i32>} : memref<30x128xf32, #tpu.memory_space<vmem>>, vector<30x128xf32>,
    %cst_20 = arith.constant 0.000000e+00 : f32
    %25 = vector.broadcast %cst_20 : f32 to vector<28x128xf32>
    %c0_21 = arith.constant 0 : index
    %c0_22 = arith.constant 0 : index
    %26 = vector.load %arg7[%c0_21, %c0_22] : memref<30x128xf32, #tpu.memory_space<vmem>>, vector<28x128xf32>
    %27 = arith.truncf %26 : vector<28x128xf32> to vector<28x128xbf16>
    %c0_23 = arith.constant 0 : index
    %c0_24 = arith.constant 0 : index
    %c0_25 = arith.constant 0 : index
    %28 = vector.load %arg4[%c0_23, %c0_24, %c0_25] : memref<3x128x128xbf16, #tpu.memory_space<vmem>>, vector<1x128x128xbf16>
    %29 = vector.shape_cast %28 : vector<1x128x128xbf16> to vector<128x128xbf16>
    %cst_26 = arith.constant dense<0.000000e+00> : vector<28x128xf32>
    %30 = tpu.matmul %27, %29, %cst_26 {dimension_numbers = #tpu.dot_dimension_numbers<[1], [0], [0], [1], [0, 0, 1, 1], [], []>} : vector<28x128xbf16>, vector<128x128xbf16>, vector<28x128xf32> -> vector<28x128xf32>
    %31 = arith.addf %25, %30 : vector<28x128xf32>
    %c1_27 = arith.constant 1 : index
    %c0_28 = arith.constant 0 : index
    %32 = vector.load %arg7[%c1_27, %c0_28] : memref<30x128xf32, #tpu.memory_space<vmem>>, vector<28x128xf32>
    %33 = arith.truncf %32 : vector<28x128xf32> to vector<28x128xbf16>
    %c1_29 = arith.constant 1 : index
    %c0_30 = arith.constant 0 : index
    %c0_31 = arith.constant 0 : index
    %34 = vector.load %arg4[%c1_29, %c0_30, %c0_31] : memref<3x128x128xbf16, #tpu.memory_space<vmem>>, vector<1x128x128xbf16>
    %35 = vector.shape_cast %34 : vector<1x128x128xbf16> to vector<128x128xbf16>
    %cst_32 = arith.constant dense<0.000000e+00> : vector<28x128xf32>
    %36 = tpu.matmul %33, %35, %cst_32 {dimension_numbers = #tpu.dot_dimension_numbers<[1], [0], [0], [1], [0, 0, 1, 1], [], []>} : vector<28x128xbf16>, vector<128x128xbf16>, vector<28x128xf32> -> vector<28x128xf32>
    %37 = arith.addf %31, %36 : vector<28x128xf32>
    %c2_33 = arith.constant 2 : index
    %c0_34 = arith.constant 0 : index
    %38 = vector.load %arg7[%c2_33, %c0_34] : memref<30x128xf32, #tpu.memory_space<vmem>>, vector<28x128xf32>
    %39 = arith.truncf %38 : vector<28x128xf32> to vector<28x128xbf16>
    %c2_35 = arith.constant 2 : index
    %c0_36 = arith.constant 0 : index
    %c0_37 = arith.constant 0 : index
    %40 = vector.load %arg4[%c2_35, %c0_36, %c0_37] : memref<3x128x128xbf16, #tpu.memory_space<vmem>>, vector<1x128x128xbf16>
    %41 = vector.shape_cast %40 : vector<1x128x128xbf16> to vector<128x128xbf16>
    %cst_38 = arith.constant dense<0.000000e+00> : vector<28x128xf32>
    %42 = tpu.matmul %39, %41, %cst_38 {dimension_numbers = #tpu.dot_dimension_numbers<[1], [0], [0], [1], [0, 0, 1, 1], [], []>} : vector<28x128xbf16>, vector<128x128xbf16>, vector<28x128xf32> -> vector<28x128xf32>
    %43 = arith.addf %37, %42 : vector<28x128xf32>
    %c0_39 = arith.constant 0 : index
    %c0_40 = arith.constant 0 : index
    %44 = vector.load %arg5[%c0_39, %c0_40] : memref<1x128xf32, #tpu.memory_space<vmem>>, vector<1x128xf32>
    %45 = vector.broadcast %44 : vector<1x128xf32> to vector<28x128xf32>
    %46 = arith.addf %43, %45 : vector<28x128xf32>
    %cst_41 = arith.constant 0.000000e+00 : f32
    %47 = vector.broadcast %cst_41 : f32 to vector<28x128xf32>
    %48 = arith.maximumf %46, %47 : vector<28x128xf32>
    %c0_42 = arith.constant 0 : index
    %c0_43 = arith.constant 0 : index
    %49 = vector.load %arg6[%c0_42, %c0_43] : memref<32x128xf32, #tpu.memory_space<vmem>>, vector<28x128xf32>
    tpu.vector_store %arg6[%c0_42, %c0_43], %48 {strides = array<i32>} : memref<32x128xf32, #tpu.memory_space<vmem>>, vector<28x128xf32>,
    return
  }
  func.func @transform_0(%arg0: i32) -> (i32, i32) {
    %c0_i32 = arith.constant 0 : i32
    %c0_i32_0 = arith.constant 0 : i32
    return %arg0, %c0_i32 : i32, i32
  }
  func.func @transform_1(%arg0: i32) -> (i32, i32, i32) {
    %c0_i32 = arith.constant 0 : i32
    %c0_i32_0 = arith.constant 0 : i32
    %c0_i32_1 = arith.constant 0 : i32
    %c0_i32_2 = arith.constant 0 : i32
    return %c0_i32, %c0_i32_0, %c0_i32_1 : i32, i32, i32
  }
  func.func @transform_2(%arg0: i32) -> (i32, i32) {
    %c0_i32 = arith.constant 0 : i32
    %c0_i32_0 = arith.constant 0 : i32
    %c0_i32_1 = arith.constant 0 : i32
    return %c0_i32, %c0_i32_0 : i32, i32
  }
  func.func @transform_3(%arg0: i32) -> (i32, i32, i32) {
    %c0_i32 = arith.constant 0 : i32
    %c0_i32_0 = arith.constant 0 : i32
    %c0_i32_1 = arith.constant 0 : i32
    %c0_i32_2 = arith.constant 0 : i32
    return %c0_i32, %c0_i32_0, %c0_i32_1 : i32, i32, i32
  }
  func.func @transform_4(%arg0: i32) -> (i32, i32) {
    %c0_i32 = arith.constant 0 : i32
    %c0_i32_0 = arith.constant 0 : i32
    %c0_i32_1 = arith.constant 0 : i32
    return %c0_i32, %c0_i32_0 : i32, i32
  }
  func.func @transform_5(%arg0: i32) -> (i32, i32) {
    %c0_i32 = arith.constant 0 : i32
    %c0_i32_0 = arith.constant 0 : i32
    return %arg0, %c0_i32 : i32, i32
  }
}

</mosaic_0001>

<llo_original>
// kernel: tpu_custom_call.1
$region0: #{tpu_custom_call.1}
  #allocation0 [shape = 'u32[]', space=smem, size = 0x4, offset = 0x4, fixed_abs, tag = 'smem constant byte address 0x4 - core index']
  #allocation1 [shape = 'u32[144,128]{1,0:T(1,128)}', space=vmem, size = 0x12000, scoped, tag = 'internal scratch']
  #allocation2 [shape = 'f32[30,128]{1,0:T(8,128)}', space=vmem, size = 0x4000, scoped, tag = 'scratch operand']
  %s0 = inlined_call_operand.hbm [shape: f32[32,64], index: 0, kind: input, shape index: {}]
  %s1 = inlined_call_operand.hbm [shape: bf16[3,64,128], index: 1, kind: input, shape index: {}]
  %s2 = inlined_call_operand.vmem [shape: f32[1,128], index: 2, kind: input, shape index: {}]
  %s3 = inlined_call_operand.hbm [shape: bf16[3,128,128], index: 3, kind: input, shape index: {}]
  %s4 = inlined_call_operand.vmem [shape: f32[1,128], index: 4, kind: input, shape index: {}]
  %s5 = inlined_call_operand.hbm [shape: f32[32,128], index: 5, kind: output, shape index: {}]
  %s6 = sld [smem:[#allocation0]]
  $region42: #{tpu_custom_call.1} parent=0
    _
  %s8 = ssub.s32 1, %s6
  %s9 = scalar_select 0, %s8, %s6
  $region1: #{tpu_custom_call.1} parent=0
    #allocation3 [shape = 'u8[16384]{0}', space=vmem, size = 0x4000, scoped, tag = 'input window, operand 0, single buffered']
    #allocation4 [shape = 's32[1]{0}', space=sflag, size = 0x4, scoped, tag = 'scoped memory for tpu_custom_call.1']
    #allocation5 [shape = 's32[1]{0}', space=sflag, size = 0x4, scoped, tag = 'scoped memory for tpu_custom_call.1']
    #allocation6 [shape = 'u8[49152]{0}', space=vmem, size = 0xc000, scoped, tag = 'input window, operand 1, single buffered']
    #allocation7 [shape = 's32[1]{0}', space=sflag, size = 0x4, scoped, tag = 'scoped memory for tpu_custom_call.1']
    #allocation8 [shape = 'u8[98304]{0}', space=vmem, size = 0x18000, scoped, tag = 'input window, operand 3, single buffered']
    #allocation9 [shape = 'u8[16384]{0}', space=vmem, size = 0x4000, scoped, tag = 'output window, operand 0, single buffered']
    %10 = vsyncpa [#allocation4], 0
    %11 = vsyncpa [#allocation7], 0
    %12 = vsyncpa [#allocation5], 0
    // Predicated region
    $region2: #{tpu_custom_call.1} parent=1 // pred_check
      _
    $region3: #{tpu_custom_call.1} parent=1 // pred_check_branch
      %14 = sbr.rel (0) target = $region5
    $region4: #{tpu_custom_call.1} parent=1 // pred_region
      %s16 = ssub.s32 512, 512
      %17 = vsyncadd [#allocation4], %s16
      %s18 = sshll.u32 [#allocation3], 4
      %s19 = int_to_ptr.vmem [resolvable:$true] %s18
      %24 = dma.hbm_to_vmem [thread:$0]  %s0, 512, %s19, [#allocation4], 128, 128, 8
    $region5: #{tpu_custom_call.1} parent=1 // pred_fallthru
      _
    // Predicated region
    $region6: #{tpu_custom_call.1} parent=1 // pred_check
      _
    $region7: #{tpu_custom_call.1} parent=1 // pred_check_branch
      %26 = sbr.rel (0) target = $region9
    $region8: #{tpu_custom_call.1} parent=1 // pred_region
      %s28 = ssub.s32 1536, 1536
      %29 = vsyncadd [#allocation7], %s28
      %s30 = sshll.u32 [#allocation6], 4
      %s31 = int_to_ptr.vmem [resolvable:$true] %s30
      %36 = dma.hbm_to_vmem [thread:$0]  %s1, 1536, %s31, [#allocation7], 64, 64, 4
    $region9: #{tpu_custom_call.1} parent=1 // pred_fallthru
      _
    // Predicated region
    $region10: #{tpu_custom_call.1} parent=1 // pred_check
      _
    $region11: #{tpu_custom_call.1} parent=1 // pred_check_branch
      %38 = sbr.rel (0) target = $region13
    $region12: #{tpu_custom_call.1} parent=1 // pred_region
      _
    $region13: #{tpu_custom_call.1} parent=1 // pred_fallthru
      _
    // Predicated region
    $region14: #{tpu_custom_call.1} parent=1 // pred_check
      _
    $region15: #{tpu_custom_call.1} parent=1 // pred_check_branch
      %40 = sbr.rel (0) target = $region17
    $region16: #{tpu_custom_call.1} parent=1 // pred_region
      %s42 = ssub.s32 3072, 3072
      %43 = vsyncadd [#allocation7], %s42
      %s44 = sshll.u32 [#allocation8], 4
      %s45 = int_to_ptr.vmem [resolvable:$true] %s44
      %50 = dma.hbm_to_vmem [thread:$0]  %s3, 3072, %s45, [#allocation7], 64, 64, 4
    $region17: #{tpu_custom_call.1} parent=1 // pred_fallthru
      _
    // Predicated region
    $region18: #{tpu_custom_call.1} parent=1 // pred_check
      _
    $region19: #{tpu_custom_call.1} parent=1 // pred_check_branch
      %52 = sbr.rel (0) target = $region21
    $region20: #{tpu_custom_call.1} parent=1 // pred_region
      _
    $region21: #{tpu_custom_call.1} parent=1 // pred_fallthru
      _
    // Predicated region
    $region22: #{tpu_custom_call.1} parent=1 // pred_check
      _
    $region23: #{tpu_custom_call.1} parent=1 // pred_check_branch
      %54 = sbr.rel (0) target = $region25
    $region24: #{tpu_custom_call.1} parent=1 // pred_region
      %55 = dma.done [#allocation4], 512
    $region25: #{tpu_custom_call.1} parent=1 // pred_fallthru
      _
    // Predicated region
    $region26: #{tpu_custom_call.1} parent=1 // pred_check
      _
    $region27: #{tpu_custom_call.1} parent=1 // pred_check_branch
      %57 = sbr.rel (0) target = $region29
    $region28: #{tpu_custom_call.1} parent=1 // pred_region
      %58 = dma.done [#allocation7], 1536
    $region29: #{tpu_custom_call.1} parent=1 // pred_fallthru
      _
    // Predicated region
    $region30: #{tpu_custom_call.1} parent=1 // pred_check
      _
    $region31: #{tpu_custom_call.1} parent=1 // pred_check_branch
      %60 = sbr.rel (0) target = $region33
    $region32: #{tpu_custom_call.1} parent=1 // pred_region
      %61 = dma.done [#allocation7], 3072
    $region33: #{tpu_custom_call.1} parent=1 // pred_fallthru
      _
    %v63 = vld [vmem:[#allocation3] sm:$0xff]
    %v64 = vld [vmem:[#allocation3 + $0x8] sm:$0xff]
    %v65 = vld [vmem:[#allocation3 + $0x10] sm:$0xff]
    %v66 = vld [vmem:[#allocation3 + $0x18] sm:$0x3f]
    %v67 = vpack.c.bf16 %v64, %v63
    %v68 = vpack.c.bf16 %v66, %v65
    %v69 = vld [vmem:[#allocation6] sm:$0xf]
    %v70 = vld [vmem:[#allocation6 + $0x4] sm:$0xf]
    %v71 = vld [vmem:[#allocation6 + $0x8] sm:$0xf]
    %v72 = vld [vmem:[#allocation6 + $0xc] sm:$0xf]
    %v73 = vld [vmem:[#allocation6 + $0x10] sm:$0xf]
    %v74 = vld [vmem:[#allocation6 + $0x14] sm:$0xf]
    %v75 = vld [vmem:[#allocation6 + $0x18] sm:$0xf]
    %v76 = vld [vmem:[#allocation6 + $0x1c] sm:$0xf]
    %v77 = vld [vmem:[#allocation3 + $0x1] sm:$0xff]
    %v78 = vld [vmem:[#allocation3 + $0x9] sm:$0xff]
    %v79 = vld [vmem:[#allocation3 + $0x11] sm:$0xff]
    %v80 = vld [vmem:[#allocation3 + $0x19] sm:$0x3f]
    %v81 = vpack.c.bf16 %v78, %v77
    %v82 = vpack.c.bf16 %v80, %v79
    %s83 = scalar_lea.vmem [#allocation6], 32
    %v84 = vld [vmem:[%s83] sm:$0xf]
    %v85 = vld [vmem:[%s83 + $0x4] sm:$0xf]
    %v86 = vld [vmem:[%s83 + $0x8] sm:$0xf]
    %v87 = vld [vmem:[%s83 + $0xc] sm:$0xf]
    %v88 = vld [vmem:[%s83 + $0x10] sm:$0xf]
    %v89 = vld [vmem:[%s83 + $0x14] sm:$0xf]
    %v90 = vld [vmem:[%s83 + $0x18] sm:$0xf]
    %v91 = vld [vmem:[%s83 + $0x1c] sm:$0xf]
    %v100 = vunpack.c.l.b16 %v84
    %v101 = vunpack.c.l.b16 %v85
    %v102 = vunpack.c.l.b16 %v86
    %v103 = vunpack.c.l.b16 %v87
    %v104 = vunpack.c.l.b16 %v88
    %v105 = vunpack.c.l.b16 %v89
    %v106 = vunpack.c.l.b16 %v90
    %v107 = vunpack.c.l.b16 %v91
    %v108 = vpack.c.b16 %v101, %v100
    %v109 = vpack.c.b16 %v103, %v102
    %v110 = vpack.c.b16 %v105, %v104
    %v111 = vpack.c.b16 %v107, %v106
    %vm116 = vcmask 523264
    %v118 = vsel %vm116, %v81, 0
    %v121 = vsel %vm116, %v82, 0
    %123 = vmatprep.subr.bf16.mxu0 0
    %124 = vmatpush1.bf16.msra.mxu0 %v108
    %125 = vmatprep.subr.bf16.mxu0 0
    %126 = vmatpush1.bf16.msra.mxu0 %v109
    %127 = vmatprep.subr.bf16.mxu0 0
    %128 = vmatpush1.bf16.msra.mxu0 %v110
    %129 = vmatprep.subr.bf16.mxu0 0
    %130 = vmatpush1.bf16.msra.mxu0 %v111
    %131 = vmatprep.subr.bf16.mxu0 0
    %132 = vmatpush1.bf16.msra.mxu0 0
    %133 = vmatprep.subr.bf16.mxu0 0
    %134 = vmatpush1.bf16.msra.mxu0 0
    %135 = vmatprep.subr.bf16.mxu0 0
    %136 = vmatpush1.bf16.msra.mxu0 0
    %137 = vmatprep.subr.bf16.mxu0 0
    %138 = vmatpush1.bf16.msra.mxu0 0
    %139 = vmatprep.subr.bf16.mxu0 0
    %140 = vmatpush1.bf16.msra.mxu0 0
    %141 = vmatprep.subr.bf16.mxu0 0
    %142 = vmatpush1.bf16.msra.mxu0 0
    %143 = vmatprep.subr.bf16.mxu0 0
    %144 = vmatpush1.bf16.msra.mxu0 0
    %145 = vmatprep.subr.bf16.mxu0 0
    %146 = vmatpush1.bf16.msra.mxu0 0
    %147 = vmatprep.subr.bf16.mxu0 0
    %148 = vmatpush1.bf16.msra.mxu0 0
    %149 = vmatprep.subr.bf16.mxu0 0
    %150 = vmatpush1.bf16.msra.mxu0 0
    %151 = vmatprep.subr.bf16.mxu0 0
    %152 = vmatpush1.bf16.msra.mxu0 0
    %153 = vmatprep.subr.bf16.mxu0 0
    %154 = vmatpush1.bf16.msra.mxu0 0
    %155 = vmatprep.mubr.bf16.mxu0 0
    %156 = vmatmul.mubr.bf16.gmra.mrb[0].mxu0 %v118
    %v157 = vpop.f32.mrb[0].mxu0
    %v158 = vadd.f32 0.0, %v157
    %v159 = vpop.f32.mrb[0].mxu0
    %v160 = vpop.f32.mrb[0].mxu0
    %v161 = vadd.f32 0.0, %v160
    %v162 = vpop.f32.mrb[0].mxu0
    %163 = vmatprep.mubr.bf16.mxu0 0
    %164 = vmatmul.mubr.bf16.gmra.mrb[0].mxu0 %v121
    %v165 = vpop.f32.mrb[0].mxu0
    %v166 = vadd.f32 0.0, %v165
    %v167 = vpop.f32.mrb[0].mxu0
    %v168 = vpop.f32.mrb[0].mxu0
    %v169 = vadd.f32 0.0, %v168
    %v170 = vpop.f32.mrb[0].mxu0
    %171 = vdwg.mxu0
    %v180 = vunpack.c.l.b16 %v69
    %v181 = vunpack.c.l.b16 %v70
    %v182 = vunpack.c.l.b16 %v71
    %v183 = vunpack.c.l.b16 %v72
    %v184 = vunpack.c.l.b16 %v73
    %v185 = vunpack.c.l.b16 %v74
    %v186 = vunpack.c.l.b16 %v75
    %v187 = vunpack.c.l.b16 %v76
    %v188 = vpack.c.b16 %v181, %v180
    %v189 = vpack.c.b16 %v183, %v182
    %v190 = vpack.c.b16 %v185, %v184
    %v191 = vpack.c.b16 %v187, %v186
    %v197 = vsel %vm116, %v67, 0
    %v200 = vsel %vm116, %v68, 0
    %202 = vmatprep.subr.bf16.mxu0 0
    %203 = vmatpush1.bf16.msra.mxu0 %v188
    %204 = vmatprep.subr.bf16.mxu0 0
    %205 = vmatpush1.bf16.msra.mxu0 %v189
    %206 = vmatprep.subr.bf16.mxu0 0
    %207 = vmatpush1.bf16.msra.mxu0 %v190
    %208 = vmatprep.subr.bf16.mxu0 0
    %209 = vmatpush1.bf16.msra.mxu0 %v191
    %210 = vmatprep.subr.bf16.mxu0 0
    %211 = vmatpush1.bf16.msra.mxu0 0
    %212 = vmatprep.subr.bf16.mxu0 0
    %213 = vmatpush1.bf16.msra.mxu0 0
    %214 = vmatprep.subr.bf16.mxu0 0
    %215 = vmatpush1.bf16.msra.mxu0 0
    %216 = vmatprep.subr.bf16.mxu0 0
    %217 = vmatpush1.bf16.msra.mxu0 0
    %218 = vmatprep.subr.bf16.mxu0 0
    %219 = vmatpush1.bf16.msra.mxu0 0
    %220 = vmatprep.subr.bf16.mxu0 0
    %221 = vmatpush1.bf16.msra.mxu0 0
    %222 = vmatprep.subr.bf16.mxu0 0
    %223 = vmatpush1.bf16.msra.mxu0 0
    %224 = vmatprep.subr.bf16.mxu0 0
    %225 = vmatpush1.bf16.msra.mxu0 0
    %226 = vmatprep.subr.bf16.mxu0 0
    %227 = vmatpush1.bf16.msra.mxu0 0
    %228 = vmatprep.subr.bf16.mxu0 0
    %229 = vmatpush1.bf16.msra.mxu0 0
    %230 = vmatprep.subr.bf16.mxu0 0
    %231 = vmatpush1.bf16.msra.mxu0 0
    %232 = vmatprep.subr.bf16.mxu0 0
    %233 = vmatpush1.bf16.msra.mxu0 0
    %234 = vmatprep.mubr.bf16.mxu0 0
    %235 = vmatmul.mubr.bf16.gmra.mrb[0].mxu0 %v197
    %v236 = vpop.f32.mrb[0].mxu0
    %v237 = vadd.f32 %v158, %v236
    %v238 = vpop.f32.mrb[0].mxu0
    %v239 = vpop.f32.mrb[0].mxu0
    %v240 = vadd.f32 %v161, %v239
    %v241 = vpop.f32.mrb[0].mxu0
    %242 = vmatprep.mubr.bf16.mxu0 0
    %243 = vmatmul.mubr.bf16.gmra.mrb[0].mxu0 %v200
    %v244 = vpop.f32.mrb[0].mxu0
    %v245 = vadd.f32 %v166, %v244
    %v246 = vpop.f32.mrb[0].mxu0
    %v247 = vpop.f32.mrb[0].mxu0
    %v248 = vadd.f32 %v169, %v247
    %v249 = vpop.f32.mrb[0].mxu0
    %250 = vdwg.mxu0
    %v251 = vld [vmem:[#allocation3 + $0x2] sm:$0xff]
    %v252 = vld [vmem:[#allocation3 + $0xa] sm:$0xff]
    %v253 = vld [vmem:[#allocation3 + $0x12] sm:$0xff]
    %v254 = vld [vmem:[#allocation3 + $0x1a] sm:$0x3f]
    %v255 = vpack.c.bf16 %v252, %v251
    %v256 = vpack.c.bf16 %v254, %v253
    %s257 = scalar_lea.vmem [#allocation6], 64
    %v258 = vld [vmem:[%s257] sm:$0xf]
    %v259 = vld [vmem:[%s257 + $0x4] sm:$0xf]
    %v260 = vld [vmem:[%s257 + $0x8] sm:$0xf]
    %v261 = vld [vmem:[%s257 + $0xc] sm:$0xf]
    %v262 = vld [vmem:[%s257 + $0x10] sm:$0xf]
    %v263 = vld [vmem:[%s257 + $0x14] sm:$0xf]
    %v264 = vld [vmem:[%s257 + $0x18] sm:$0xf]
    %v265 = vld [vmem:[%s257 + $0x1c] sm:$0xf]
    %v274 = vunpack.c.l.b16 %v258
    %v275 = vunpack.c.l.b16 %v259
    %v276 = vunpack.c.l.b16 %v260
    %v277 = vunpack.c.l.b16 %v261
    %v278 = vunpack.c.l.b16 %v262
    %v279 = vunpack.c.l.b16 %v263
    %v280 = vunpack.c.l.b16 %v264
    %v281 = vunpack.c.l.b16 %v265
    %v282 = vpack.c.b16 %v275, %v274
    %v283 = vpack.c.b16 %v277, %v276
    %v284 = vpack.c.b16 %v279, %v278
    %v285 = vpack.c.b16 %v281, %v280
    %v291 = vsel %vm116, %v255, 0
    %v294 = vsel %vm116, %v256, 0
    %296 = vmatprep.subr.bf16.mxu0 0
    %297 = vmatpush1.bf16.msra.mxu0 %v282
    %298 = vmatprep.subr.bf16.mxu0 0
    %299 = vmatpush1.bf16.msra.mxu0 %v283
    %300 = vmatprep.subr.bf16.mxu0 0
    %301 = vmatpush1.bf16.msra.mxu0 %v284
    %302 = vmatprep.subr.bf16.mxu0 0
    %303 = vmatpush1.bf16.msra.mxu0 %v285
    %304 = vmatprep.subr.bf16.mxu0 0
    %305 = vmatpush1.bf16.msra.mxu0 0
    %306 = vmatprep.subr.bf16.mxu0 0
    %307 = vmatpush1.bf16.msra.mxu0 0
    %308 = vmatprep.subr.bf16.mxu0 0
    %309 = vmatpush1.bf16.msra.mxu0 0
    %310 = vmatprep.subr.bf16.mxu0 0
    %311 = vmatpush1.bf16.msra.mxu0 0
    %312 = vmatprep.subr.bf16.mxu0 0
    %313 = vmatpush1.bf16.msra.mxu0 0
    %314 = vmatprep.subr.bf16.mxu0 0
    %315 = vmatpush1.bf16.msra.mxu0 0
    %316 = vmatprep.subr.bf16.mxu0 0
    %317 = vmatpush1.bf16.msra.mxu0 0
    %318 = vmatprep.subr.bf16.mxu0 0
    %319 = vmatpush1.bf16.msra.mxu0 0
    %320 = vmatprep.subr.bf16.mxu0 0
    %321 = vmatpush1.bf16.msra.mxu0 0
    %322 = vmatprep.subr.bf16.mxu0 0
    %323 = vmatpush1.bf16.msra.mxu0 0
    %324 = vmatprep.subr.bf16.mxu0 0
    %325 = vmatpush1.bf16.msra.mxu0 0
    %326 = vmatprep.subr.bf16.mxu0 0
    %327 = vmatpush1.bf16.msra.mxu0 0
    %328 = vmatprep.mubr.bf16.mxu0 0
    %329 = vmatmul.mubr.bf16.gmra.mrb[0].mxu0 %v291
    %v330 = vpop.f32.mrb[0].mxu0
    %v331 = vadd.f32 0.0, %v330
    %v332 = vpop.f32.mrb[0].mxu0
    %v333 = vpop.f32.mrb[0].mxu0
    %v334 = vadd.f32 0.0, %v333
    %v335 = vpop.f32.mrb[0].mxu0
    %336 = vmatprep.mubr.bf16.mxu0 0
    %337 = vmatmul.mubr.bf16.gmra.mrb[0].mxu0 %v294
    %v338 = vpop.f32.mrb[0].mxu0
    %v339 = vadd.f32 0.0, %v338
    %v340 = vpop.f32.mrb[0].mxu0
    %v341 = vpop.f32.mrb[0].mxu0
    %v342 = vadd.f32 0.0, %v341
    %v343 = vpop.f32.mrb[0].mxu0
    %344 = vdwg.mxu0
    %v345 = vadd.f32 %v237, %v331
    %v346 = vadd.f32 %v240, %v334
    %v347 = vadd.f32 %v245, %v339
    %v348 = vadd.f32 %v248, %v342
    %v349 = vld [vmem:[%s2] sm:$0x1]
    %v351 = vlaneseq
    %v352 = vshrl.u32 %v351, 7
    %v353 = vsub.s32 0, %v352
    %v354 = vrot.slane %v349, %v353
    %v356 = vadd.f32 %v345, %v354
    %v357 = vadd.f32 %v346, %v354
    %v358 = vadd.f32 %v347, %v354
    %v359 = vadd.f32 %v348, %v354
    %v360 = vmax.f32 %v356, 0.0
    %v361 = vmax.f32 %v357, 0.0
    %v362 = vmax.f32 %v358, 0.0
    %v363 = vmax.f32 %v359, 0.0
    %364 = vst [vmem:[#allocation2] sm:$0xff] %v360
    %365 = vst [vmem:[#allocation2 + $0x8] sm:$0xff] %v361
    %366 = vst [vmem:[#allocation2 + $0x10] sm:$0xff] %v362
    %367 = vst [vmem:[#allocation2 + $0x18] sm:$0x3f] %v363
    %v368 = vld [vmem:[#allocation2] sm:$0xff]
    %v369 = vld [vmem:[#allocation2 + $0x8] sm:$0xff]
    %v370 = vld [vmem:[#allocation2 + $0x10] sm:$0xff]
    %v371 = vld [vmem:[#allocation2 + $0x18] sm:$0xf]
    %v372 = vpack.c.bf16 %v369, %v368
    %v373 = vpack.c.bf16 %v371, %v370
    %v374 = vld [vmem:[#allocation8] sm:$0xf]
    %v375 = vld [vmem:[#allocation8 + $0x4] sm:$0xf]
    %v376 = vld [vmem:[#allocation8 + $0x8] sm:$0xf]
    %v377 = vld [vmem:[#allocation8 + $0xc] sm:$0xf]
    %v378 = vld [vmem:[#allocation8 + $0x10] sm:$0xf]
    %v379 = vld [vmem:[#allocation8 + $0x14] sm:$0xf]
    %v380 = vld [vmem:[#allocation8 + $0x18] sm:$0xf]
    %v381 = vld [vmem:[#allocation8 + $0x1c] sm:$0xf]
    %v382 = vld [vmem:[#allocation8 + $0x20] sm:$0xf]
    %v383 = vld [vmem:[#allocation8 + $0x24] sm:$0xf]
    %v384 = vld [vmem:[#allocation8 + $0x28] sm:$0xf]
    %v385 = vld [vmem:[#allocation8 + $0x2c] sm:$0xf]
    %v386 = vld [vmem:[#allocation8 + $0x30] sm:$0xf]
    %v387 = vld [vmem:[#allocation8 + $0x34] sm:$0xf]
    %v388 = vld [vmem:[#allocation8 + $0x38] sm:$0xf]
    %v389 = vld [vmem:[#allocation8 + $0x3c] sm:$0xf]
    %v390 = vld [vmem:[#allocation2 + $0x1] sm:$0xff]
    %v391 = vld [vmem:[#allocation2 + $0x9] sm:$0xff]
    %v392 = vld [vmem:[#allocation2 + $0x11] sm:$0xff]
    %v393 = vld [vmem:[#allocation2 + $0x19] sm:$0xf]
    %v394 = vpack.c.bf16 %v391, %v390
    %v395 = vpack.c.bf16 %v393, %v392
    %s396 = scalar_lea.vmem [#allocation8], 64
    %v397 = vld [vmem:[%s396] sm:$0xf]
    %v398 = vld [vmem:[%s396 + $0x4] sm:$0xf]
    %v399 = vld [vmem:[%s396 + $0x8] sm:$0xf]
    %v400 = vld [vmem:[%s396 + $0xc] sm:$0xf]
    %v401 = vld [vmem:[%s396 + $0x10] sm:$0xf]
    %v402 = vld [vmem:[%s396 + $0x14] sm:$0xf]
    %v403 = vld [vmem:[%s396 + $0x18] sm:$0xf]
    %v404 = vld [vmem:[%s396 + $0x1c] sm:$0xf]
    %v405 = vld [vmem:[%s396 + $0x20] sm:$0xf]
    %v406 = vld [vmem:[%s396 + $0x24] sm:$0xf]
    %v407 = vld [vmem:[%s396 + $0x28] sm:$0xf]
    %v408 = vld [vmem:[%s396 + $0x2c] sm:$0xf]
    %v409 = vld [vmem:[%s396 + $0x30] sm:$0xf]
    %v410 = vld [vmem:[%s396 + $0x34] sm:$0xf]
    %v411 = vld [vmem:[%s396 + $0x38] sm:$0xf]
    %v412 = vld [vmem:[%s396 + $0x3c] sm:$0xf]
    %v429 = vunpack.c.l.b16 %v397
    %v430 = vunpack.c.l.b16 %v398
    %v431 = vunpack.c.l.b16 %v399
    %v432 = vunpack.c.l.b16 %v400
    %v433 = vunpack.c.l.b16 %v401
    %v434 = vunpack.c.l.b16 %v402
    %v435 = vunpack.c.l.b16 %v403
    %v436 = vunpack.c.l.b16 %v404
    %v437 = vunpack.c.l.b16 %v405
    %v438 = vunpack.c.l.b16 %v406
    %v439 = vunpack.c.l.b16 %v407
    %v440 = vunpack.c.l.b16 %v408
    %v441 = vunpack.c.l.b16 %v409
    %v442 = vunpack.c.l.b16 %v410
    %v443 = vunpack.c.l.b16 %v411
    %v444 = vunpack.c.l.b16 %v412
    %v445 = vpack.c.b16 %v430, %v429
    %v446 = vpack.c.b16 %v432, %v431
    %v447 = vpack.c.b16 %v434, %v433
    %v448 = vpack.c.b16 %v436, %v435
    %v449 = vpack.c.b16 %v438, %v437
    %v450 = vpack.c.b16 %v440, %v439
    %v451 = vpack.c.b16 %v442, %v441
    %v452 = vpack.c.b16 %v444, %v443
    %461 = vmatprep.subr.bf16.mxu0 0
    %462 = vmatpush1.bf16.msra.mxu0 %v445
    %463 = vmatprep.subr.bf16.mxu0 0
    %464 = vmatpush1.bf16.msra.mxu0 %v446
    %465 = vmatprep.subr.bf16.mxu0 0
    %466 = vmatpush1.bf16.msra.mxu0 %v447
    %467 = vmatprep.subr.bf16.mxu0 0
    %468 = vmatpush1.bf16.msra.mxu0 %v448
    %469 = vmatprep.subr.bf16.mxu0 0
    %470 = vmatpush1.bf16.msra.mxu0 %v449
    %471 = vmatprep.subr.bf16.mxu0 0
    %472 = vmatpush1.bf16.msra.mxu0 %v450
    %473 = vmatprep.subr.bf16.mxu0 0
    %474 = vmatpush1.bf16.msra.mxu0 %v451
    %475 = vmatprep.subr.bf16.mxu0 0
    %476 = vmatpush1.bf16.msra.mxu0 %v452
    %477 = vmatprep.subr.bf16.mxu0 0
    %478 = vmatpush1.bf16.msra.mxu0 0
    %479 = vmatprep.subr.bf16.mxu0 0
    %480 = vmatpush1.bf16.msra.mxu0 0
    %481 = vmatprep.subr.bf16.mxu0 0
    %482 = vmatpush1.bf16.msra.mxu0 0
    %483 = vmatprep.subr.bf16.mxu0 0
    %484 = vmatpush1.bf16.msra.mxu0 0
    %485 = vmatprep.subr.bf16.mxu0 0
    %486 = vmatpush1.bf16.msra.mxu0 0
    %487 = vmatprep.subr.bf16.mxu0 0
    %488 = vmatpush1.bf16.msra.mxu0 0
    %489 = vmatprep.subr.bf16.mxu0 0
    %490 = vmatpush1.bf16.msra.mxu0 0
    %491 = vmatprep.subr.bf16.mxu0 0
    %492 = vmatpush1.bf16.msra.mxu0 0
    %493 = vmatprep.mubr.bf16.mxu0 0
    %494 = vmatmul.mubr.bf16.gmra.mrb[0].mxu0 %v394
    %v495 = vpop.f32.mrb[0].mxu0
    %v496 = vadd.f32 0.0, %v495
    %v497 = vpop.f32.mrb[0].mxu0
    %v498 = vpop.f32.mrb[0].mxu0
    %v499 = vadd.f32 0.0, %v498
    %v500 = vpop.f32.mrb[0].mxu0
    %501 = vmatprep.mubr.bf16.mxu0 0
    %502 = vmatmul.mubr.bf16.gmra.mrb[0].mxu0 %v395
    %v503 = vpop.f32.mrb[0].mxu0
    %v504 = vadd.f32 0.0, %v503
    %v505 = vpop.f32.mrb[0].mxu0
    %v506 = vpop.f32.mrb[0].mxu0
    %v507 = vadd.f32 0.0, %v506
    %v508 = vpop.f32.mrb[0].mxu0
    %509 = vdwg.mxu0
    %v526 = vunpack.c.l.b16 %v374
    %v527 = vunpack.c.l.b16 %v375
    %v528 = vunpack.c.l.b16 %v376
    %v529 = vunpack.c.l.b16 %v377
    %v530 = vunpack.c.l.b16 %v378
    %v531 = vunpack.c.l.b16 %v379
    %v532 = vunpack.c.l.b16 %v380
    %v533 = vunpack.c.l.b16 %v381
    %v534 = vunpack.c.l.b16 %v382
    %v535 = vunpack.c.l.b16 %v383
    %v536 = vunpack.c.l.b16 %v384
    %v537 = vunpack.c.l.b16 %v385
    %v538 = vunpack.c.l.b16 %v386
    %v539 = vunpack.c.l.b16 %v387
    %v540 = vunpack.c.l.b16 %v388
    %v541 = vunpack.c.l.b16 %v389
    %v542 = vpack.c.b16 %v527, %v526
    %v543 = vpack.c.b16 %v529, %v528
    %v544 = vpack.c.b16 %v531, %v530
    %v545 = vpack.c.b16 %v533, %v532
    %v546 = vpack.c.b16 %v535, %v534
    %v547 = vpack.c.b16 %v537, %v536
    %v548 = vpack.c.b16 %v539, %v538
    %v549 = vpack.c.b16 %v541, %v540
    %558 = vmatprep.subr.bf16.mxu0 0
    %559 = vmatpush1.bf16.msra.mxu0 %v542
    %560 = vmatprep.subr.bf16.mxu0 0
    %561 = vmatpush1.bf16.msra.mxu0 %v543
    %562 = vmatprep.subr.bf16.mxu0 0
    %563 = vmatpush1.bf16.msra.mxu0 %v544
    %564 = vmatprep.subr.bf16.mxu0 0
    %565 = vmatpush1.bf16.msra.mxu0 %v545
    %566 = vmatprep.subr.bf16.mxu0 0
    %567 = vmatpush1.bf16.msra.mxu0 %v546
    %568 = vmatprep.subr.bf16.mxu0 0
    %569 = vmatpush1.bf16.msra.mxu0 %v547
    %570 = vmatprep.subr.bf16.mxu0 0
    %571 = vmatpush1.bf16.msra.mxu0 %v548
    %572 = vmatprep.subr.bf16.mxu0 0
    %573 = vmatpush1.bf16.msra.mxu0 %v549
    %574 = vmatprep.subr.bf16.mxu0 0
    %575 = vmatpush1.bf16.msra.mxu0 0
    %576 = vmatprep.subr.bf16.mxu0 0
    %577 = vmatpush1.bf16.msra.mxu0 0
    %578 = vmatprep.subr.bf16.mxu0 0
    %579 = vmatpush1.bf16.msra.mxu0 0
    %580 = vmatprep.subr.bf16.mxu0 0
    %581 = vmatpush1.bf16.msra.mxu0 0
    %582 = vmatprep.subr.bf16.mxu0 0
    %583 = vmatpush1.bf16.msra.mxu0 0
    %584 = vmatprep.subr.bf16.mxu0 0
    %585 = vmatpush1.bf16.msra.mxu0 0
    %586 = vmatprep.subr.bf16.mxu0 0
    %587 = vmatpush1.bf16.msra.mxu0 0
    %588 = vmatprep.subr.bf16.mxu0 0
    %589 = vmatpush1.bf16.msra.mxu0 0
    %590 = vmatprep.mubr.bf16.mxu0 0
    %591 = vmatmul.mubr.bf16.gmra.mrb[0].mxu0 %v372
    %v592 = vpop.f32.mrb[0].mxu0
    %v593 = vadd.f32 %v496, %v592
    %v594 = vpop.f32.mrb[0].mxu0
    %v595 = vpop.f32.mrb[0].mxu0
    %v596 = vadd.f32 %v499, %v595
    %v597 = vpop.f32.mrb[0].mxu0
    %598 = vmatprep.mubr.bf16.mxu0 0
    %599 = vmatmul.mubr.bf16.gmra.mrb[0].mxu0 %v373
    %v600 = vpop.f32.mrb[0].mxu0
    %v601 = vadd.f32 %v504, %v600
    %v602 = vpop.f32.mrb[0].mxu0
    %v603 = vpop.f32.mrb[0].mxu0
    %v604 = vadd.f32 %v507, %v603
    %v605 = vpop.f32.mrb[0].mxu0
    %606 = vdwg.mxu0
    %v607 = vld [vmem:[#allocation2 + $0x2] sm:$0xff]
    %v608 = vld [vmem:[#allocation2 + $0xa] sm:$0xff]
    %v609 = vld [vmem:[#allocation2 + $0x12] sm:$0xff]
    %v610 = vld [vmem:[#allocation2 + $0x1a] sm:$0xf]
    %v611 = vpack.c.bf16 %v608, %v607
    %v612 = vpack.c.bf16 %v610, %v609
    %s613 = scalar_lea.vmem [#allocation8], 128
    %v614 = vld [vmem:[%s613] sm:$0xf]
    %v615 = vld [vmem:[%s613 + $0x4] sm:$0xf]
    %v616 = vld [vmem:[%s613 + $0x8] sm:$0xf]
    %v617 = vld [vmem:[%s613 + $0xc] sm:$0xf]
    %v618 = vld [vmem:[%s613 + $0x10] sm:$0xf]
    %v619 = vld [vmem:[%s613 + $0x14] sm:$0xf]
    %v620 = vld [vmem:[%s613 + $0x18] sm:$0xf]
    %v621 = vld [vmem:[%s613 + $0x1c] sm:$0xf]
    %v622 = vld [vmem:[%s613 + $0x20] sm:$0xf]
    %v623 = vld [vmem:[%s613 + $0x24] sm:$0xf]
    %v624 = vld [vmem:[%s613 + $0x28] sm:$0xf]
    %v625 = vld [vmem:[%s613 + $0x2c] sm:$0xf]
    %v626 = vld [vmem:[%s613 + $0x30] sm:$0xf]
    %v627 = vld [vmem:[%s613 + $0x34] sm:$0xf]
    %v628 = vld [vmem:[%s613 + $0x38] sm:$0xf]
    %v629 = vld [vmem:[%s613 + $0x3c] sm:$0xf]
    %v646 = vunpack.c.l.b16 %v614
    %v647 = vunpack.c.l.b16 %v615
    %v648 = vunpack.c.l.b16 %v616
    %v649 = vunpack.c.l.b16 %v617
    %v650 = vunpack.c.l.b16 %v618
    %v651 = vunpack.c.l.b16 %v619
    %v652 = vunpack.c.l.b16 %v620
    %v653 = vunpack.c.l.b16 %v621
    %v654 = vunpack.c.l.b16 %v622
    %v655 = vunpack.c.l.b16 %v623
    %v656 = vunpack.c.l.b16 %v624
    %v657 = vunpack.c.l.b16 %v625
    %v658 = vunpack.c.l.b16 %v626
    %v659 = vunpack.c.l.b16 %v627
    %v660 = vunpack.c.l.b16 %v628
    %v661 = vunpack.c.l.b16 %v629
    %v662 = vpack.c.b16 %v647, %v646
    %v663 = vpack.c.b16 %v649, %v648
    %v664 = vpack.c.b16 %v651, %v650
    %v665 = vpack.c.b16 %v653, %v652
    %v666 = vpack.c.b16 %v655, %v654
    %v667 = vpack.c.b16 %v657, %v656
    %v668 = vpack.c.b16 %v659, %v658
    %v669 = vpack.c.b16 %v661, %v660
    %678 = vmatprep.subr.bf16.mxu0 0
    %679 = vmatpush1.bf16.msra.mxu0 %v662
    %680 = vmatprep.subr.bf16.mxu0 0
    %681 = vmatpush1.bf16.msra.mxu0 %v663
    %682 = vmatprep.subr.bf16.mxu0 0
    %683 = vmatpush1.bf16.msra.mxu0 %v664
    %684 = vmatprep.subr.bf16.mxu0 0
    %685 = vmatpush1.bf16.msra.mxu0 %v665
    %686 = vmatprep.subr.bf16.mxu0 0
    %687 = vmatpush1.bf16.msra.mxu0 %v666
    %688 = vmatprep.subr.bf16.mxu0 0
    %689 = vmatpush1.bf16.msra.mxu0 %v667
    %690 = vmatprep.subr.bf16.mxu0 0
    %691 = vmatpush1.bf16.msra.mxu0 %v668
    %692 = vmatprep.subr.bf16.mxu0 0
    %693 = vmatpush1.bf16.msra.mxu0 %v669
    %694 = vmatprep.subr.bf16.mxu0 0
    %695 = vmatpush1.bf16.msra.mxu0 0
    %696 = vmatprep.subr.bf16.mxu0 0
    %697 = vmatpush1.bf16.msra.mxu0 0
    %698 = vmatprep.subr.bf16.mxu0 0
    %699 = vmatpush1.bf16.msra.mxu0 0
    %700 = vmatprep.subr.bf16.mxu0 0
    %701 = vmatpush1.bf16.msra.mxu0 0
    %702 = vmatprep.subr.bf16.mxu0 0
    %703 = vmatpush1.bf16.msra.mxu0 0
    %704 = vmatprep.subr.bf16.mxu0 0
    %705 = vmatpush1.bf16.msra.mxu0 0
    %706 = vmatprep.subr.bf16.mxu0 0
    %707 = vmatpush1.bf16.msra.mxu0 0
    %708 = vmatprep.subr.bf16.mxu0 0
    %709 = vmatpush1.bf16.msra.mxu0 0
    %710 = vmatprep.mubr.bf16.mxu0 0
    %711 = vmatmul.mubr.bf16.gmra.mrb[0].mxu0 %v611
    %v712 = vpop.f32.mrb[0].mxu0
    %v713 = vadd.f32 0.0, %v712
    %v714 = vpop.f32.mrb[0].mxu0
    %v715 = vpop.f32.mrb[0].mxu0
    %v716 = vadd.f32 0.0, %v715
    %v717 = vpop.f32.mrb[0].mxu0
    %718 = vmatprep.mubr.bf16.mxu0 0
    %719 = vmatmul.mubr.bf16.gmra.mrb[0].mxu0 %v612
    %v720 = vpop.f32.mrb[0].mxu0
    %v721 = vadd.f32 0.0, %v720
    %v722 = vpop.f32.mrb[0].mxu0
    %v723 = vpop.f32.mrb[0].mxu0
    %v724 = vadd.f32 0.0, %v723
    %v725 = vpop.f32.mrb[0].mxu0
    %726 = vdwg.mxu0
    %v727 = vadd.f32 %v593, %v713
    %v728 = vadd.f32 %v596, %v716
    %v729 = vadd.f32 %v601, %v721
    %v730 = vadd.f32 %v604, %v724
    %v731 = vld [vmem:[%s4] sm:$0x1]
    %v733 = vlaneseq
    %v734 = vshrl.u32 %v733, 7
    %v735 = vsub.s32 0, %v734
    %v736 = vrot.slane %v731, %v735
    %v738 = vadd.f32 %v727, %v736
    %v739 = vadd.f32 %v728, %v736
    %v740 = vadd.f32 %v729, %v736
    %v741 = vadd.f32 %v730, %v736
    %v742 = vmax.f32 %v738, 0.0
    %v743 = vmax.f32 %v739, 0.0
    %v744 = vmax.f32 %v740, 0.0
    %v745 = vmax.f32 %v741, 0.0
    %746 = vst [vmem:[#allocation9] sm:$0xff] %v742
    %747 = vst [vmem:[#allocation9 + $0x8] sm:$0xff] %v743
    %748 = vst [vmem:[#allocation9 + $0x10] sm:$0xff] %v744
    %749 = vst [vmem:[#allocation9 + $0x18] sm:$0xf] %v745
    // Predicated region
    $region34: #{tpu_custom_call.1} parent=1 // pred_check
      _
    $region35: #{tpu_custom_call.1} parent=1 // pred_check_branch
      %751 = sbr.rel (0) target = $region37
    $region36: #{tpu_custom_call.1} parent=1 // pred_region
      %s753 = ssub.s32 512, 512
      %754 = vsyncadd [#allocation5], %s753
      %s755 = sshll.u32 [#allocation9], 4
      %s756 = int_to_ptr.vmem [resolvable:$true] %s755
      %761 = dma.vmem_to_hbm [thread:$0]  %s756, 512, %s5, [#allocation5], 128, 128, 8
    $region37: #{tpu_custom_call.1} parent=1 // pred_fallthru
      _
    // Predicated region
    $region38: #{tpu_custom_call.1} parent=1 // pred_check
      _
    $region39: #{tpu_custom_call.1} parent=1 // pred_check_branch
      %763 = sbr.rel (0) target = $region41
    $region40: #{tpu_custom_call.1} parent=1 // pred_region
      %764 = dma.done [#allocation5], 512
    $region41: #{tpu_custom_call.1} parent=1 // pred_fallthru
      _
    %765 = vsyncpa [#allocation4], 1
    %766 = vsyncpa [#allocation7], 1
    %767 = vsyncpa [#allocation5], 1

</llo_original>
